<compile_context>
chip_gen: v7x
topology: tpu7x:2x2x1
jax: 0.10.0
libtpu: 0.0.40
codegen_flags: <defaults>
</compile_context>

<pallas_src>
import functools
import math

import jax
import jax.numpy as jnp
from jax.experimental import pallas as pl
from jax.experimental.pallas import tpu as pltpu


def _round_up(x, m):
    return ((x + m - 1) // m) * m


def _sine_encoding_kernel(e_ref, f1_ref, p1_ref, f2_ref, p2_ref,
                          eeig_ref, sc_ref, *, constant):
    # e_ref: (TN, 1)   f1/p1: (1, H+1)   f2/p2: (1, H)
    # eeig_ref: (TN, H+1)   sc_ref: (TN, H)
    e = e_ref[...].astype(jnp.float32)                  # (TN, 1)
    ee = e * constant                                   # (TN, 1)
    tn = e.shape[0]

    # eeig slab: lane 0 = e, lanes 1..H/2 = sin(pe), lanes H/2+1..H = cos(pe)
    d1 = eeig_ref.shape[-1]
    trig1 = jnp.sin(ee * f1_ref[...] + p1_ref[...])     # (TN, H+1)
    col = jax.lax.broadcasted_iota(jnp.int32, (tn, d1), 1)
    eeig = jnp.where(col == 0, e, trig1)
    eeig_ref[...] = eeig.astype(eeig_ref.dtype)

    # sin/cos slab: lanes 0..H/2-1 = sin(pe), lanes H/2..H-1 = cos(pe)
    sc = jnp.sin(ee * f2_ref[...] + p2_ref[...])        # (TN, H)
    sc_ref[...] = sc.astype(sc_ref.dtype)


def sine_encoding(e, *, hidden_dim=128, constant=100.0, tile_n=1024):
    """e: (N,) float array -> (eeig (N, hidden_dim+1), sin_cos (N, hidden_dim))."""
    assert e.ndim == 1
    n = e.shape[0]
    half = hidden_dim // 2
    out_dtype = e.dtype

    # Host-side per-lane constants; tiny, stay resident across all grid steps.
    div = jnp.exp(jnp.arange(0, hidden_dim, 2, dtype=jnp.float32)
                  * (-math.log(10000.0) / hidden_dim))            # (half,)
    zeros_h = jnp.zeros((half,), jnp.float32)
    halfpi_h = jnp.full((half,), jnp.pi / 2, jnp.float32)
    zero1 = jnp.zeros((1,), jnp.float32)
    freq_eeig = jnp.concatenate([zero1, div, div]).reshape(1, hidden_dim + 1)
    phase_eeig = jnp.concatenate([zero1, zeros_h, halfpi_h]).reshape(1, hidden_dim + 1)
    freq_sc = jnp.concatenate([div, div]).reshape(1, hidden_dim)
    phase_sc = jnp.concatenate([zeros_h, halfpi_h]).reshape(1, hidden_dim)

    # Large row tiles; pad N so every tile is full (no tiny last block).
    tile_n = max(8, min(tile_n, _round_up(n, 8)))
    n_pad = _round_up(n, tile_n)
    e2 = e.reshape(n, 1).astype(jnp.float32)
    if n_pad != n:
        e2 = jnp.pad(e2, ((0, n_pad - n), (0, 0)))

    kernel = functools.partial(_sine_encoding_kernel, constant=float(constant))

    eeig, sc = pl.pallas_call(
        kernel,
        out_shape=(jax.ShapeDtypeStruct((n_pad, hidden_dim + 1), out_dtype),
                   jax.ShapeDtypeStruct((n_pad, hidden_dim), out_dtype)),
        grid_spec=pltpu.PrefetchScalarGridSpec(
            num_scalar_prefetch=0,
            grid=(n_pad // tile_n,),
            in_specs=[
                pl.BlockSpec((tile_n, 1), lambda i: (i, 0)),            # e rows
                pl.BlockSpec((1, hidden_dim + 1), lambda i: (0, 0)),    # freq (eeig)
                pl.BlockSpec((1, hidden_dim + 1), lambda i: (0, 0)),    # phase (eeig)
                pl.BlockSpec((1, hidden_dim), lambda i: (0, 0)),        # freq (sc)
                pl.BlockSpec((1, hidden_dim), lambda i: (0, 0)),        # phase (sc)
            ],
            out_specs=[
                pl.BlockSpec((tile_n, hidden_dim + 1), lambda i: (i, 0)),
                pl.BlockSpec((tile_n, hidden_dim), lambda i: (i, 0)),
            ],
        ),
        compiler_params=pltpu.CompilerParams(
            dimension_semantics=("parallel",)),
    )(e2, freq_eeig, phase_eeig, freq_sc, phase_sc)

    if n_pad != n:
        eeig = eeig[:n]
        sc = sc[:n]
    return eeig, sc


def sine_encoding_ref(e, *, hidden_dim=128, constant=100.0):
    """Pure-JAX faithful translation of the PyTorch forward (uses exact cos)."""
    ee = e * constant
    div = jnp.exp(jnp.arange(0, hidden_dim, 2, dtype=jnp.float32)
                  * (-math.log(10000.0) / hidden_dim))
    pe = ee[:, None] * div[None, :]
    sc = jnp.concatenate([jnp.sin(pe), jnp.cos(pe)], axis=1)
    eeig = jnp.concatenate([e[:, None], sc], axis=1)
    return eeig, sc


if __name__ == "__main__":
    key = jax.random.PRNGKey(0)
    # Laplacian-eigenvalue-style inputs in [0, 2]; hidden_dim = module default.
    N, hidden_dim = 8, 128
    e = jax.random.uniform(key, (N,), dtype=jnp.float32, minval=0.0, maxval=2.0)

    eeig, sc = sine_encoding(e, hidden_dim=hidden_dim)
    eeig = jax.block_until_ready(eeig)
    sc = jax.block_until_ready(sc)

    r_eeig, r_sc = sine_encoding_ref(e, hidden_dim=hidden_dim)
    assert eeig.shape == (N, hidden_dim + 1)
    assert sc.shape == (N, hidden_dim)
    assert jnp.allclose(eeig, r_eeig, atol=1e-4, rtol=1e-5), "eeig mismatch vs ref"
    assert jnp.allclose(sc, r_sc, atol=1e-4, rtol=1e-5), "sin_cos mismatch vs ref"

    # Exercise padding + multi-tile path with a batch not divisible by the tile.
    N2 = 13
    e_b = jax.random.uniform(jax.random.PRNGKey(1), (N2,), dtype=jnp.float32,
                             minval=0.0, maxval=2.0)
    eeig2, sc2 = sine_encoding(e_b, hidden_dim=hidden_dim, tile_n=8)
    eeig2 = jax.block_until_ready(eeig2)
    sc2 = jax.block_until_ready(sc2)
    r_eeig2, r_sc2 = sine_encoding_ref(e_b, hidden_dim=hidden_dim)
    assert eeig2.shape == (N2, hidden_dim + 1) and sc2.shape == (N2, hidden_dim)
    assert jnp.allclose(eeig2, r_eeig2, atol=1e-4, rtol=1e-5)
    assert jnp.allclose(sc2, r_sc2, atol=1e-4, rtol=1e-5)

    print("KERNEL_OK")
</pallas_src>

<mosaic_0001>
module attributes {stable_mosaic.version = 11 : i64} {
  func.func @_sine_encoding_kernel(%arg0: i32, %arg1: memref<8x1xf32, #tpu.memory_space<vmem>>, %arg2: memref<1x129xf32, #tpu.memory_space<vmem>>, %arg3: memref<1x129xf32, #tpu.memory_space<vmem>>, %arg4: memref<1x128xf32, #tpu.memory_space<vmem>>, %arg5: memref<1x128xf32, #tpu.memory_space<vmem>>, %arg6: memref<8x129xf32, #tpu.memory_space<vmem>>, %arg7: memref<8x128xf32, #tpu.memory_space<vmem>>) attributes {dimension_semantics = [#tpu.dimension_semantics<parallel>], iteration_bounds = array<i64: 1>, scalar_prefetch = 0 : i64, scratch_operands = 0 : i64, tpu.core_type = #tpu.core_type<tc>, window_params = [{transform_indices = @transform_0, window_bounds = array<i64: 8, 1>}, {pipeline_mode = #tpu.pipeline_mode<synchronous>, transform_indices = @transform_1, window_bounds = array<i64: 1, 129>}, {pipeline_mode = #tpu.pipeline_mode<synchronous>, transform_indices = @transform_2, window_bounds = array<i64: 1, 129>}, {pipeline_mode = #tpu.pipeline_mode<synchronous>, transform_indices = @transform_3, window_bounds = array<i64: 1, 128>}, {pipeline_mode = #tpu.pipeline_mode<synchronous>, transform_indices = @transform_4, window_bounds = array<i64: 1, 128>}, {transform_indices = @transform_5, window_bounds = array<i64: 8, 129>}, {transform_indices = @transform_6, window_bounds = array<i64: 8, 128>}]} {
    %c0 = arith.constant 0 : index
    %c0_0 = arith.constant 0 : index
    %0 = vector.load %arg1[%c0, %c0_0] : memref<8x1xf32, #tpu.memory_space<vmem>>, vector<8x1xf32>
    %cst = arith.constant 1.000000e+02 : f32
    %1 = vector.broadcast %cst : f32 to vector<8x1xf32>
    %2 = arith.mulf %0, %1 : vector<8x1xf32>
    %c0_1 = arith.constant 0 : index
    %c0_2 = arith.constant 0 : index
    %3 = vector.load %arg2[%c0_1, %c0_2] : memref<1x129xf32, #tpu.memory_space<vmem>>, vector<1x129xf32>
    %4 = vector.broadcast %2 : vector<8x1xf32> to vector<8x129xf32>
    %5 = vector.broadcast %3 : vector<1x129xf32> to vector<8x129xf32>
    %6 = arith.mulf %4, %5 : vector<8x129xf32>
    %c0_3 = arith.constant 0 : index
    %c0_4 = arith.constant 0 : index
    %7 = vector.load %arg3[%c0_3, %c0_4] : memref<1x129xf32, #tpu.memory_space<vmem>>, vector<1x129xf32>
    %8 = vector.broadcast %7 : vector<1x129xf32> to vector<8x129xf32>
    %9 = arith.addf %6, %8 : vector<8x129xf32>
    %10 = math.sin %9 : vector<8x129xf32>
    %11 = tpu.iota {dimensions = array<i32: 1>} : vector<8x129xi32>
    %c0_i32 = arith.constant 0 : i32
    %12 = vector.broadcast %c0_i32 : i32 to vector<8x129xi32>
    %13 = arith.cmpi eq, %11, %12 : vector<8x129xi32>
    %14 = vector.shape_cast %0 : vector<8x1xf32> to vector<8x1xf32>
    %15 = vector.broadcast %14 : vector<8x1xf32> to vector<8x129xf32>
    %16 = arith.select %13, %15, %10 : vector<8x129xi1>, vector<8x129xf32>
    %c0_5 = arith.constant 0 : index
    %c0_6 = arith.constant 0 : index
    %17 = vector.load %arg6[%c0_5, %c0_6] : memref<8x129xf32, #tpu.memory_space<vmem>>, vector<8x129xf32>
    tpu.vector_store %arg6[%c0_5, %c0_6], %16 {strides = array<i32>} : memref<8x129xf32, #tpu.memory_space<vmem>>, vector<8x129xf32>,
    %c0_7 = arith.constant 0 : index
    %c0_8 = arith.constant 0 : index
    %18 = vector.load %arg4[%c0_7, %c0_8] : memref<1x128xf32, #tpu.memory_space<vmem>>, vector<1x128xf32>
    %19 = vector.broadcast %2 : vector<8x1xf32> to vector<8x128xf32>
    %20 = vector.broadcast %18 : vector<1x128xf32> to vector<8x128xf32>
    %21 = arith.mulf %19, %20 : vector<8x128xf32>
    %c0_9 = arith.constant 0 : index
    %c0_10 = arith.constant 0 : index
    %22 = vector.load %arg5[%c0_9, %c0_10] : memref<1x128xf32, #tpu.memory_space<vmem>>, vector<1x128xf32>
    %23 = vector.broadcast %22 : vector<1x128xf32> to vector<8x128xf32>
    %24 = arith.addf %21, %23 : vector<8x128xf32>
    %25 = math.sin %24 : vector<8x128xf32>
    %c0_11 = arith.constant 0 : index
    %c0_12 = arith.constant 0 : index
    %26 = vector.load %arg7[%c0_11, %c0_12] : memref<8x128xf32, #tpu.memory_space<vmem>>, vector<8x128xf32>
    tpu.vector_store %arg7[%c0_11, %c0_12], %25 {strides = array<i32>} : memref<8x128xf32, #tpu.memory_space<vmem>>, vector<8x128xf32>,
    return
  }
  func.func @transform_0(%arg0: i32) -> (i32, i32) {
    %c0_i32 = arith.constant 0 : i32
    %c0_i32_0 = arith.constant 0 : i32
    return %arg0, %c0_i32 : i32, i32
  }
  func.func @transform_1(%arg0: i32) -> (i32, i32) {
    %c0_i32 = arith.constant 0 : i32
    %c0_i32_0 = arith.constant 0 : i32
    %c0_i32_1 = arith.constant 0 : i32
    return %c0_i32, %c0_i32_0 : i32, i32
  }
  func.func @transform_2(%arg0: i32) -> (i32, i32) {
    %c0_i32 = arith.constant 0 : i32
    %c0_i32_0 = arith.constant 0 : i32
    %c0_i32_1 = arith.constant 0 : i32
    return %c0_i32, %c0_i32_0 : i32, i32
  }
  func.func @transform_3(%arg0: i32) -> (i32, i32) {
    %c0_i32 = arith.constant 0 : i32
    %c0_i32_0 = arith.constant 0 : i32
    %c0_i32_1 = arith.constant 0 : i32
    return %c0_i32, %c0_i32_0 : i32, i32
  }
  func.func @transform_4(%arg0: i32) -> (i32, i32) {
    %c0_i32 = arith.constant 0 : i32
    %c0_i32_0 = arith.constant 0 : i32
    %c0_i32_1 = arith.constant 0 : i32
    return %c0_i32, %c0_i32_0 : i32, i32
  }
  func.func @transform_5(%arg0: i32) -> (i32, i32) {
    %c0_i32 = arith.constant 0 : i32
    %c0_i32_0 = arith.constant 0 : i32
    return %arg0, %c0_i32 : i32, i32
  }
  func.func @transform_6(%arg0: i32) -> (i32, i32) {
    %c0_i32 = arith.constant 0 : i32
    %c0_i32_0 = arith.constant 0 : i32
    return %arg0, %c0_i32 : i32, i32
  }
}

</mosaic_0001>

<llo_original>
// kernel: tpu_custom_call.1
$region0: #{tpu_custom_call.1}
  #allocation0 [shape = 'u32[]', space=smem, size = 0x4, offset = 0x4, fixed_abs, tag = 'smem constant byte address 0x4 - core index']
  #allocation1 [shape = 'u32[144,128]{1,0:T(1,128)}', space=vmem, size = 0x12000, scoped, tag = 'internal scratch']
  %s0 = inlined_call_operand.vmem [shape: f32[8,1], index: 0, kind: input, shape index: {}]
  %s1 = inlined_call_operand.vmem [shape: f32[1,129], index: 1, kind: input, shape index: {}]
  %s2 = inlined_call_operand.vmem [shape: f32[1,129], index: 2, kind: input, shape index: {}]
  %s3 = inlined_call_operand.vmem [shape: f32[1,128], index: 3, kind: input, shape index: {}]
  %s4 = inlined_call_operand.vmem [shape: f32[1,128], index: 4, kind: input, shape index: {}]
  %s5 = inlined_call_operand.hbm [shape: f32[8,129], index: 5, kind: output, shape index: {0}]
  %s6 = inlined_call_operand.hbm [shape: f32[8,128], index: 6, kind: output, shape index: {1}]
  %7 = xla_tuple %s5, %s6
  %s8 = sld [smem:[#allocation0]]
  $region38: #{tpu_custom_call.1} parent=0
    _
  %s10 = ssub.s32 1, %s8
  %s11 = scalar_select 0, %s10, %s8
  $region1: #{tpu_custom_call.1} parent=0
    #allocation2 [shape = 'u8[8192]{0}', space=vmem, size = 0x2000, scoped, tag = 'output window, operand 0, single buffered']
    #allocation3 [shape = 's32[1]{0}', space=sflag, size = 0x4, scoped, tag = 'scoped memory for tpu_custom_call.1']
    #allocation4 [shape = 'u8[4096]{0}', space=vmem, size = 0x1000, scoped, tag = 'output window, operand 1, single buffered']
    #allocation5 [shape = 's32[1]{0}', space=sflag, size = 0x4, scoped, tag = 'scoped memory for tpu_custom_call.1']
    %12 = vsyncpa [#allocation3], 0
    %13 = vsyncpa [#allocation5], 0
    // Predicated region
    $region2: #{tpu_custom_call.1} parent=1 // pred_check
      _
    $region3: #{tpu_custom_call.1} parent=1 // pred_check_branch
      %15 = sbr.rel (0) target = $region5
    $region4: #{tpu_custom_call.1} parent=1 // pred_region
      _
    $region5: #{tpu_custom_call.1} parent=1 // pred_fallthru
      _
    // Predicated region
    $region6: #{tpu_custom_call.1} parent=1 // pred_check
      _
    $region7: #{tpu_custom_call.1} parent=1 // pred_check_branch
      %17 = sbr.rel (0) target = $region9
    $region8: #{tpu_custom_call.1} parent=1 // pred_region
      _
    $region9: #{tpu_custom_call.1} parent=1 // pred_fallthru
      _
    // Predicated region
    $region10: #{tpu_custom_call.1} parent=1 // pred_check
      _
    $region11: #{tpu_custom_call.1} parent=1 // pred_check_branch
      %19 = sbr.rel (0) target = $region13
    $region12: #{tpu_custom_call.1} parent=1 // pred_region
      _
    $region13: #{tpu_custom_call.1} parent=1 // pred_fallthru
      _
    // Predicated region
    $region14: #{tpu_custom_call.1} parent=1 // pred_check
      _
    $region15: #{tpu_custom_call.1} parent=1 // pred_check_branch
      %21 = sbr.rel (0) target = $region17
    $region16: #{tpu_custom_call.1} parent=1 // pred_region
      _
    $region17: #{tpu_custom_call.1} parent=1 // pred_fallthru
      _
    // Predicated region
    $region18: #{tpu_custom_call.1} parent=1 // pred_check
      _
    $region19: #{tpu_custom_call.1} parent=1 // pred_check_branch
      %23 = sbr.rel (0) target = $region21
    $region20: #{tpu_custom_call.1} parent=1 // pred_region
      _
    $region21: #{tpu_custom_call.1} parent=1 // pred_fallthru
      _
    %v24 = vld [vmem:[%s0] sm:$0xff]
    %v25 = vmul.f32 %v24, 100.0
    %v26 = vld [vmem:[%s1] sm:$0x3]
    %28 = vset.pattern.permute.xlu0 0
    %29 = vperm.xlu0 %28, %v25
    %v30 = vpop.permute.xlu0 %29
    %v33 = vlaneseq
    %v34 = vshrl.u32 %v33, 7
    %v35 = vsub.s32 0, %v34
    %v36 = vrot.slane %v26, %v35
    %v37 = vlaneseq
    %v38 = vshrl.u32 %v37, 7
    %v39 = vsub.s32 1, %v38
    %v40 = vrot.slane %v26, %v39
    %v43 = vmul.f32 %v30, %v36
    %v44 = vmul.f32 %v30, %v40
    %v45 = vld [vmem:[%s2] sm:$0x3]
    %v47 = vlaneseq
    %v48 = vshrl.u32 %v47, 7
    %v49 = vsub.s32 0, %v48
    %v50 = vrot.slane %v45, %v49
    %v51 = vlaneseq
    %v52 = vshrl.u32 %v51, 7
    %v53 = vsub.s32 1, %v52
    %v54 = vrot.slane %v45, %v53
    %v57 = vadd.f32 %v43, %v50
    %v58 = vadd.f32 %v44, %v54
    %v59 = vand.u32 2147483647, %v57
    %vm60 = vcmp.le.f32.partialorder %v59, 0.7853982
    %vm61 = vcmp.lt.s32.totalorder %v57, 0
    %v62 = vand.u32 %v57, 2139095040
    %v63 = vshrl.u32 %v62, 23
    %v64 = vsub.s32 %v63, 127
    %v65 = vand.u32 2147483647, %v57
    %v66 = vand.u32 %v65, 8388607
    %v67 = vor.u32 %v66, 8388608
    %v68 = vsub.s32 0, %v67
    %v69 = vadd.s32 %v64, 1
    %vm70 = vcmp.gt.s32.totalorder %v69, 0
    %v71 = vsel %vm70, %v69, 0
    %v72 = vshrl.u32 %v71, 5
    %v73 = vand.u32 %v71, 31
    %v74 = vsub.s32 32, %v73
    %v75 = vshrl.u32 683565275, %v74
    %v76 = vshll.u32 683565275, %v73
    %v77 = vshrl.u32 2475754826, %v74
    %v78 = vor.u32 %v76, %v77
    %v79 = vshll.u32 2475754826, %v73
    %v80 = vshrl.u32 2131351028, %v74
    %v81 = vor.u32 %v79, %v80
    %v82 = vshll.u32 2131351028, %v73
    %v83 = vshrl.u32 2102212464, %v74
    %v84 = vor.u32 %v82, %v83
    %v85 = vshll.u32 2102212464, %v73
    %v86 = vshrl.u32 920167782, %v74
    %v87 = vor.u32 %v85, %v86
    %v88 = vshll.u32 920167782, %v73
    %v89 = vshrl.u32 1326507024, %v74
    %v90 = vor.u32 %v88, %v89
    %vm91 = vcmp.lt.s32.totalorder %v72, 1
    %vm92 = vcmp.lt.s32.totalorder %v72, 2
    %vm93 = vcmp.lt.s32.totalorder %v72, 3
    %vm94 = vcmp.lt.s32.totalorder %v72, 4
    %v95 = vsel %vm91, %v75, %v78
    %v96 = vsel %vm94, %v84, 2102212464
    %v97 = vsel %vm93, %v81, %v96
    %v98 = vsel %vm92, %v95, %v97
    %v99 = vsel %vm91, %v78, %v81
    %v100 = vsel %vm94, %v87, 920167782
    %v101 = vsel %vm93, %v84, %v100
    %v102 = vsel %vm92, %v99, %v101
    %v103 = vsel %vm91, %v81, %v84
    %v104 = vsel %vm94, %v90, 1326507024
    %v105 = vsel %vm93, %v87, %v104
    %v106 = vsel %vm92, %v103, %v105
    %v107 = vshll.u32 %v67, 8
    %v108 = vmul.u32.u64.compose %v107, %v106
    %v109 = vextract.low.u32 %v108
    %v110 = vextract.high.u32 %v108
    %v111 = vmul.u32.u64.compose %v107, %v102
    %v112 = vextract.low.u32 %v111
    %v113 = vextract.high.u32 %v111
    %v114 = vmul.u32 %v107, %v98
    %v115 = vadd.s32 %v110, %v112
    %vm116 = vc.u32 %v110, %v112
    %v117 = vadd.s32 %v113, 1
    %v118 = vsel %vm116, %v117, %v113
    %v119 = vadd.s32 %v114, %v118
    %v120 = vadd.s32 %v119, 536870912
    %v121 = vshrl.u32 %v120, 30
    %v122 = vshll.u32 %v121, 30
    %v123 = vsub.s32 %v119, %v122
    %vm124 = vcmp.lt.s32.totalorder %v123, 0
    %v125 = vsub.s32 0, %v123
    %v126 = vsel %vm124, %v125, %v123
    %v127 = vclz %v126
    %v128 = vsub.s32 %v127, 2
    %vm129 = vcmp.gt.s32.totalorder 0, %v128
    %v130 = vsel %vm129, 0, %v128
    %v131 = vsub.s32 32, %v130
    %v132 = vshll.u32 %v123, %v130
    %v133 = vshrl.u32 %v115, %v131
    %v134 = vor.u32 %v132, %v133
    %v135 = vsub.s32 4294967266, %v130
    %v136 = vadd.s32 %v135, 127
    %v137 = vshll.u32 %v136, 23
    %v138 = vor.u32 4788187, %v137
    %v139 = vand.u32 2147483647, %v138
    %v141 = vcvt.s32.f32 %v134
    %v142 = vmul.f32 %v141, %v139
    %v143 = vxor.u32 %v142, 2147483648
    %v144 = vsel %vm61, %v143, %v142
    %v145 = vsub.s32 4, %v121
    %v146 = vsel %vm61, %v145, %v121
    %v147 = vsel %vm60, %v57, %v144
    %v148 = vsel %vm60, 0, %v146
    %v149 = vcosq.f32.pop %v147
    %v150 = vsinq.f32.pop %v147
    %vm151 = vweird.f32 %v57
    %v152 = vadd.s32 %v148, 3
    %v153 = vand.u32 %v152, 3
    %vm154 = vcmp.lt.s32.totalorder %v153, 2
    %vm155 = vcmp.eq.s32.totalorder %v153, 0
    %v156 = vxor.u32 %v150, 2147483648
    %v157 = vsel %vm155, %v149, %v156
    %vm158 = vcmp.eq.s32.totalorder %v153, 2
    %v159 = vxor.u32 %v149, 2147483648
    %v160 = vsel %vm158, %v159, %v150
    %v161 = vsel %vm154, %v157, %v160
    %v162 = vsel %vm151, nan, %v161
    %v163 = vand.u32 2147483647, %v58
    %vm164 = vcmp.le.f32.partialorder %v163, 0.7853982
    %vm165 = vcmp.lt.s32.totalorder %v58, 0
    %v166 = vand.u32 %v58, 2139095040
    %v167 = vshrl.u32 %v166, 23
    %v168 = vsub.s32 %v167, 127
    %v169 = vand.u32 2147483647, %v58
    %v170 = vand.u32 %v169, 8388607
    %v171 = vor.u32 %v170, 8388608
    %v172 = vsub.s32 0, %v171
    %v173 = vadd.s32 %v168, 1
    %vm174 = vcmp.gt.s32.totalorder %v173, 0
    %v175 = vsel %vm174, %v173, 0
    %v176 = vshrl.u32 %v175, 5
    %v177 = vand.u32 %v175, 31
    %v178 = vsub.s32 32, %v177
    %v179 = vshrl.u32 683565275, %v178
    %v180 = vshll.u32 683565275, %v177
    %v181 = vshrl.u32 2475754826, %v178
    %v182 = vor.u32 %v180, %v181
    %v183 = vshll.u32 2475754826, %v177
    %v184 = vshrl.u32 2131351028, %v178
    %v185 = vor.u32 %v183, %v184
    %v186 = vshll.u32 2131351028, %v177
    %v187 = vshrl.u32 2102212464, %v178
    %v188 = vor.u32 %v186, %v187
    %v189 = vshll.u32 2102212464, %v177
    %v190 = vshrl.u32 920167782, %v178
    %v191 = vor.u32 %v189, %v190
    %v192 = vshll.u32 920167782, %v177
    %v193 = vshrl.u32 1326507024, %v178
    %v194 = vor.u32 %v192, %v193
    %vm195 = vcmp.lt.s32.totalorder %v176, 1
    %vm196 = vcmp.lt.s32.totalorder %v176, 2
    %vm197 = vcmp.lt.s32.totalorder %v176, 3
    %vm198 = vcmp.lt.s32.totalorder %v176, 4
    %v199 = vsel %vm195, %v179, %v182
    %v200 = vsel %vm198, %v188, 2102212464
    %v201 = vsel %vm197, %v185, %v200
    %v202 = vsel %vm196, %v199, %v201
    %v203 = vsel %vm195, %v182, %v185
    %v204 = vsel %vm198, %v191, 920167782
    %v205 = vsel %vm197, %v188, %v204
    %v206 = vsel %vm196, %v203, %v205
    %v207 = vsel %vm195, %v185, %v188
    %v208 = vsel %vm198, %v194, 1326507024
    %v209 = vsel %vm197, %v191, %v208
    %v210 = vsel %vm196, %v207, %v209
    %v211 = vshll.u32 %v171, 8
    %v212 = vmul.u32.u64.compose %v211, %v210
    %v213 = vextract.low.u32 %v212
    %v214 = vextract.high.u32 %v212
    %v215 = vmul.u32.u64.compose %v211, %v206
    %v216 = vextract.low.u32 %v215
    %v217 = vextract.high.u32 %v215
    %v218 = vmul.u32 %v211, %v202
    %v219 = vadd.s32 %v214, %v216
    %vm220 = vc.u32 %v214, %v216
    %v221 = vadd.s32 %v217, 1
    %v222 = vsel %vm220, %v221, %v217
    %v223 = vadd.s32 %v218, %v222
    %v224 = vadd.s32 %v223, 536870912
    %v225 = vshrl.u32 %v224, 30
    %v226 = vshll.u32 %v225, 30
    %v227 = vsub.s32 %v223, %v226
    %vm228 = vcmp.lt.s32.totalorder %v227, 0
    %v229 = vsub.s32 0, %v227
    %v230 = vsel %vm228, %v229, %v227
    %v231 = vclz %v230
    %v232 = vsub.s32 %v231, 2
    %vm233 = vcmp.gt.s32.totalorder 0, %v232
    %v234 = vsel %vm233, 0, %v232
    %v235 = vsub.s32 32, %v234
    %v236 = vshll.u32 %v227, %v234
    %v237 = vshrl.u32 %v219, %v235
    %v238 = vor.u32 %v236, %v237
    %v239 = vsub.s32 4294967266, %v234
    %v240 = vadd.s32 %v239, 127
    %v241 = vshll.u32 %v240, 23
    %v242 = vor.u32 4788187, %v241
    %v243 = vand.u32 2147483647, %v242
    %v245 = vcvt.s32.f32 %v238
    %v246 = vmul.f32 %v245, %v243
    %v247 = vxor.u32 %v246, 2147483648
    %v248 = vsel %vm165, %v247, %v246
    %v249 = vsub.s32 4, %v225
    %v250 = vsel %vm165, %v249, %v225
    %v251 = vsel %vm164, %v58, %v248
    %v252 = vsel %vm164, 0, %v250
    %v253 = vcosq.f32.pop %v251
    %v254 = vsinq.f32.pop %v251
    %vm255 = vweird.f32 %v58
    %v256 = vadd.s32 %v252, 3
    %v257 = vand.u32 %v256, 3
    %vm258 = vcmp.lt.s32.totalorder %v257, 2
    %vm259 = vcmp.eq.s32.totalorder %v257, 0
    %v260 = vxor.u32 %v254, 2147483648
    %v261 = vsel %vm259, %v253, %v260
    %vm262 = vcmp.eq.s32.totalorder %v257, 2
    %v263 = vxor.u32 %v253, 2147483648
    %v264 = vsel %vm262, %v263, %v254
    %v265 = vsel %vm258, %v261, %v264
    %v266 = vsel %vm255, nan, %v265
    %v267 = vlaneseq
    %v268 = vand.u32 %v267, 127
    %v269 = vadd.s32 %v268, 128
    %vm270 = vcmp.eq.s32.totalorder %v268, 0
    %vm271 = vcmp.eq.s32.totalorder %v269, 0
    %273 = vset.pattern.permute.xlu0 0
    %274 = vperm.xlu0 %273, %v24
    %v275 = vpop.permute.xlu0 %274
    %v277 = vsel %vm270, %v275, %v162
    %v278 = vsel %vm271, %v275, %v266
    %279 = vst [vmem:[#allocation2] sm:$0xff] %v277
    %vm280 = vcmask 7168
    %281 = vst.msk [vmem:[#allocation2 + $0x8] sm:$0xff] %vm280, %v278
    %v282 = vld [vmem:[%s3] sm:$0x1]
    %v284 = vlaneseq
    %v285 = vshrl.u32 %v284, 7
    %v286 = vsub.s32 0, %v285
    %v287 = vrot.slane %v282, %v286
    %v289 = vmul.f32 %v30, %v287
    %v290 = vld [vmem:[%s4] sm:$0x1]
    %v292 = vlaneseq
    %v293 = vshrl.u32 %v292, 7
    %v294 = vsub.s32 0, %v293
    %v295 = vrot.slane %v290, %v294
    %v297 = vadd.f32 %v289, %v295
    %v298 = vand.u32 2147483647, %v297
    %vm299 = vcmp.le.f32.partialorder %v298, 0.7853982
    %vm300 = vcmp.lt.s32.totalorder %v297, 0
    %v301 = vand.u32 %v297, 2139095040
    %v302 = vshrl.u32 %v301, 23
    %v303 = vsub.s32 %v302, 127
    %v304 = vand.u32 2147483647, %v297
    %v305 = vand.u32 %v304, 8388607
    %v306 = vor.u32 %v305, 8388608
    %v307 = vsub.s32 0, %v306
    %v308 = vadd.s32 %v303, 1
    %vm309 = vcmp.gt.s32.totalorder %v308, 0
    %v310 = vsel %vm309, %v308, 0
    %v311 = vshrl.u32 %v310, 5
    %v312 = vand.u32 %v310, 31
    %v313 = vsub.s32 32, %v312
    %v314 = vshrl.u32 683565275, %v313
    %v315 = vshll.u32 683565275, %v312
    %v316 = vshrl.u32 2475754826, %v313
    %v317 = vor.u32 %v315, %v316
    %v318 = vshll.u32 2475754826, %v312
    %v319 = vshrl.u32 2131351028, %v313
    %v320 = vor.u32 %v318, %v319
    %v321 = vshll.u32 2131351028, %v312
    %v322 = vshrl.u32 2102212464, %v313
    %v323 = vor.u32 %v321, %v322
    %v324 = vshll.u32 2102212464, %v312
    %v325 = vshrl.u32 920167782, %v313
    %v326 = vor.u32 %v324, %v325
    %v327 = vshll.u32 920167782, %v312
    %v328 = vshrl.u32 1326507024, %v313
    %v329 = vor.u32 %v327, %v328
    %vm330 = vcmp.lt.s32.totalorder %v311, 1
    %vm331 = vcmp.lt.s32.totalorder %v311, 2
    %vm332 = vcmp.lt.s32.totalorder %v311, 3
    %vm333 = vcmp.lt.s32.totalorder %v311, 4
    %v334 = vsel %vm330, %v314, %v317
    %v335 = vsel %vm333, %v323, 2102212464
    %v336 = vsel %vm332, %v320, %v335
    %v337 = vsel %vm331, %v334, %v336
    %v338 = vsel %vm330, %v317, %v320
    %v339 = vsel %vm333, %v326, 920167782
    %v340 = vsel %vm332, %v323, %v339
    %v341 = vsel %vm331, %v338, %v340
    %v342 = vsel %vm330, %v320, %v323
    %v343 = vsel %vm333, %v329, 1326507024
    %v344 = vsel %vm332, %v326, %v343
    %v345 = vsel %vm331, %v342, %v344
    %v346 = vshll.u32 %v306, 8
    %v347 = vmul.u32.u64.compose %v346, %v345
    %v348 = vextract.low.u32 %v347
    %v349 = vextract.high.u32 %v347
    %v350 = vmul.u32.u64.compose %v346, %v341
    %v351 = vextract.low.u32 %v350
    %v352 = vextract.high.u32 %v350
    %v353 = vmul.u32 %v346, %v337
    %v354 = vadd.s32 %v349, %v351
    %vm355 = vc.u32 %v349, %v351
    %v356 = vadd.s32 %v352, 1
    %v357 = vsel %vm355, %v356, %v352
    %v358 = vadd.s32 %v353, %v357
    %v359 = vadd.s32 %v358, 536870912
    %v360 = vshrl.u32 %v359, 30
    %v361 = vshll.u32 %v360, 30
    %v362 = vsub.s32 %v358, %v361
    %vm363 = vcmp.lt.s32.totalorder %v362, 0
    %v364 = vsub.s32 0, %v362
    %v365 = vsel %vm363, %v364, %v362
    %v366 = vclz %v365
    %v367 = vsub.s32 %v366, 2
    %vm368 = vcmp.gt.s32.totalorder 0, %v367
    %v369 = vsel %vm368, 0, %v367
    %v370 = vsub.s32 32, %v369
    %v371 = vshll.u32 %v362, %v369
    %v372 = vshrl.u32 %v354, %v370
    %v373 = vor.u32 %v371, %v372
    %v374 = vsub.s32 4294967266, %v369
    %v375 = vadd.s32 %v374, 127
    %v376 = vshll.u32 %v375, 23
    %v377 = vor.u32 4788187, %v376
    %v378 = vand.u32 2147483647, %v377
    %v380 = vcvt.s32.f32 %v373
    %v381 = vmul.f32 %v380, %v378
    %v382 = vxor.u32 %v381, 2147483648
    %v383 = vsel %vm300, %v382, %v381
    %v384 = vsub.s32 4, %v360
    %v385 = vsel %vm300, %v384, %v360
    %v386 = vsel %vm299, %v297, %v383
    %v387 = vsel %vm299, 0, %v385
    %v388 = vcosq.f32.pop %v386
    %v389 = vsinq.f32.pop %v386
    %vm390 = vweird.f32 %v297
    %v391 = vadd.s32 %v387, 3
    %v392 = vand.u32 %v391, 3
    %vm393 = vcmp.lt.s32.totalorder %v392, 2
    %vm394 = vcmp.eq.s32.totalorder %v392, 0
    %v395 = vxor.u32 %v389, 2147483648
    %v396 = vsel %vm394, %v388, %v395
    %vm397 = vcmp.eq.s32.totalorder %v392, 2
    %v398 = vxor.u32 %v388, 2147483648
    %v399 = vsel %vm397, %v398, %v389
    %v400 = vsel %vm393, %v396, %v399
    %v401 = vsel %vm390, nan, %v400
    %402 = vst [vmem:[#allocation4] sm:$0xff] %v401
    // Predicated region
    $region22: #{tpu_custom_call.1} parent=1 // pred_check
      _
    $region23: #{tpu_custom_call.1} parent=1 // pred_check_branch
      %404 = sbr.rel (0) target = $region25
    $region24: #{tpu_custom_call.1} parent=1 // pred_region
      %s406 = ssub.s32 256, 256
      %407 = vsyncadd [#allocation3], %s406
      %s409 = sshll.u32 [#allocation2], 4
      %s410 = int_to_ptr.vmem [resolvable:$true] %s409
      %412 = dma.vmem_to_hbm [thread:$0]  %s410, 256, %s5, [#allocation3]
    $region25: #{tpu_custom_call.1} parent=1 // pred_fallthru
      _
    // Predicated region
    $region26: #{tpu_custom_call.1} parent=1 // pred_check
      _
    $region27: #{tpu_custom_call.1} parent=1 // pred_check_branch
      %414 = sbr.rel (0) target = $region29
    $region28: #{tpu_custom_call.1} parent=1 // pred_region
      %s416 = ssub.s32 128, 128
      %417 = vsyncadd [#allocation5], %s416
      %s419 = sshll.u32 [#allocation4], 4
      %s420 = int_to_ptr.vmem [resolvable:$true] %s419
      %422 = dma.vmem_to_hbm [thread:$0]  %s420, 128, %s6, [#allocation5]
    $region29: #{tpu_custom_call.1} parent=1 // pred_fallthru
      _
    // Predicated region
    $region30: #{tpu_custom_call.1} parent=1 // pred_check
      _
    $region31: #{tpu_custom_call.1} parent=1 // pred_check_branch
      %424 = sbr.rel (0) target = $region33
    $region32: #{tpu_custom_call.1} parent=1 // pred_region
      %425 = dma.done [#allocation3], 256
    $region33: #{tpu_custom_call.1} parent=1 // pred_fallthru
      _
    // Predicated region
    $region34: #{tpu_custom_call.1} parent=1 // pred_check
      _
    $region35: #{tpu_custom_call.1} parent=1 // pred_check_branch
      %427 = sbr.rel (0) target = $region37
    $region36: #{tpu_custom_call.1} parent=1 // pred_region
      %428 = dma.done [#allocation5], 128
    $region37: #{tpu_custom_call.1} parent=1 // pred_fallthru
      _
    %429 = vsyncpa [#allocation3], 1
    %430 = vsyncpa [#allocation5], 1

</llo_original>
